<compile_context>
chip_gen: v7x
topology: tpu7x:2x2x1
jax: 0.10.0
libtpu: 0.0.40
codegen_flags: <defaults>
</compile_context>

<pallas_src>
import functools

import jax
import jax.numpy as jnp
from jax.experimental import pallas as pl
from jax.experimental.pallas import tpu as pltpu


def generator_kernel(z_ref, w1_ref, b1_ref, w2_ref, b2_ref, o_ref):
    # Linear(latent -> hidden) on the MXU: bf16 inputs, f32 accumulation.
    # z arrives in native f32; the bf16 cast is done here (no extra wrapper pass).
    z_bf = z_ref[...].astype(jnp.bfloat16)
    h = jnp.dot(z_bf, w1_ref[...], preferred_element_type=jnp.float32)
    # Bias + ReLU epilogue in f32 (b1 is (1, hidden), broadcasts over the tile).
    h = jnp.maximum(h + b1_ref[...], 0.0)
    # Linear(hidden -> out_pad): bf16 MXU inputs, f32 accumulation.
    y = jnp.dot(h.astype(jnp.bfloat16), w2_ref[...],
                preferred_element_type=jnp.float32)
    # Bias + Tanh in f32 (EUP), then lane-dense bf16 store (out_pad % 128 == 0).
    o_ref[...] = jnp.tanh(y + b2_ref[...]).astype(o_ref.dtype)


def _round_up(x, m):
    return ((x + m - 1) // m) * m


@functools.partial(jax.jit, static_argnames=("tile_b",))
def generator_forward(z, w1, b1, w2, b2, *, tile_b=1024):
    B, latent = z.shape
    hidden, out_dim = w2.shape

    # Lane-dense padded output width (>= 128, multiple of 128).
    out_pad = max(128, _round_up(out_dim, 128))

    if B >= tile_b:
        # Big tiles amortize per-step overhead, but keep >= 2 grid steps so the
        # "parallel" batch axis can be sharded across both TCs on v7x.
        tb = min(tile_b, _round_up(pl.cdiv(B, 2), 128))
    else:
        # Tiny batch: single step; round to 16 so bf16 rows fill packed vregs.
        tb = _round_up(B, 16)

    grid = (pl.cdiv(B, tb),)

    # Small, one-time weight prep (bf16 MXU weights; zero-padded output cols).
    w1_b = w1.astype(jnp.bfloat16)
    b1_f = b1.astype(jnp.float32)
    w2_p = jnp.zeros((hidden, out_pad), jnp.bfloat16).at[:, :out_dim].set(
        w2.astype(jnp.bfloat16))
    b2_p = jnp.zeros((1, out_pad), jnp.float32).at[:, :out_dim].set(
        b2.astype(jnp.float32))

    flops = 2 * grid[0] * tb * (latent * hidden + hidden * out_pad)
    bytes_accessed = int(
        z.size * 4                      # z read (f32)
        + w1_b.size * 2 + b1_f.size * 4 # resident weights/biases
        + w2_p.size * 2 + b2_p.size * 4
        + B * out_pad * 2)              # bf16 output writeback

    out_padded = pl.pallas_call(
        generator_kernel,
        out_shape=jax.ShapeDtypeStruct((B, out_pad), jnp.bfloat16),
        grid=grid,
        in_specs=[
            pl.BlockSpec((tb, latent), lambda i: (i, 0)),       # z: tiled over batch
            pl.BlockSpec((latent, hidden), lambda i: (0, 0)),   # w1: resident
            pl.BlockSpec((1, hidden), lambda i: (0, 0)),        # b1: resident
            pl.BlockSpec((hidden, out_pad), lambda i: (0, 0)),  # w2: resident
            pl.BlockSpec((1, out_pad), lambda i: (0, 0)),       # b2: resident
        ],
        out_specs=pl.BlockSpec((tb, out_pad), lambda i: (i, 0)),
        compiler_params=pltpu.CompilerParams(
            dimension_semantics=("parallel",)),
        cost_estimate=pl.CostEstimate(
            flops=flops,
            transcendentals=grid[0] * tb * out_pad,
            bytes_accessed=bytes_accessed),
    )(z, w1_b, b1_f, w2_p, b2_p)

    # Width slice (drops lane padding) + f32 cast fuse into one pass.
    return out_padded[:, :out_dim].astype(jnp.float32)


def init_params(key, latent_dim, hidden_dim, output_dim):
    # Deterministic init mimicking PyTorch nn.Linear default:
    # U(-1/sqrt(fan_in), 1/sqrt(fan_in)) for both weights and biases.
    # Weights stored [in_features, out_features] so forward is z @ W + b
    # (equivalent to nn.Linear's z @ W.T with W stored [out, in]).
    k1, k2, k3, k4 = jax.random.split(key, 4)
    bound1 = 1.0 / jnp.sqrt(latent_dim)
    bound2 = 1.0 / jnp.sqrt(hidden_dim)
    w1 = jax.random.uniform(k1, (latent_dim, hidden_dim), jnp.float32, -bound1, bound1)
    b1 = jax.random.uniform(k2, (1, hidden_dim), jnp.float32, -bound1, bound1)
    w2 = jax.random.uniform(k3, (hidden_dim, output_dim), jnp.float32, -bound2, bound2)
    b2 = jax.random.uniform(k4, (1, output_dim), jnp.float32, -bound2, bound2)
    return w1, b1, w2, b2


if __name__ == "__main__":
    latent_dim = 32
    hidden_dim = 128
    output_dim = 64
    batch = 8

    key = jax.random.PRNGKey(0)
    kz, kp = jax.random.split(key)
    z = jax.random.normal(kz, (batch, latent_dim), dtype=jnp.float32)
    w1, b1, w2, b2 = init_params(kp, latent_dim, hidden_dim, output_dim)

    out = generator_forward(z, w1, b1, w2, b2)
    out = jax.block_until_ready(out)

    # Reference check in plain JAX (f32). Kernel uses bf16 MXU inputs / bf16
    # output with f32 accumulation, so tolerance is loosened accordingly.
    ref = jnp.tanh(jnp.maximum(z @ w1 + b1, 0.0) @ w2 + b2)
    assert out.shape == (batch, output_dim)
    assert jnp.allclose(out, ref, atol=5e-2, rtol=5e-2), (
        f"max abs err = {jnp.max(jnp.abs(out - ref))}")

    print("KERNEL_OK")
</pallas_src>

<mosaic_0001>
module attributes {stable_mosaic.version = 11 : i64} {
  func.func @generator_kernel(%arg0: i32, %arg1: memref<16x32xf32, #tpu.memory_space<vmem>>, %arg2: memref<32x128xbf16, #tpu.memory_space<vmem>>, %arg3: memref<1x128xf32, #tpu.memory_space<vmem>>, %arg4: memref<128x128xbf16, #tpu.memory_space<vmem>>, %arg5: memref<1x128xf32, #tpu.memory_space<vmem>>, %arg6: memref<16x128xbf16, #tpu.memory_space<vmem>>) attributes {dimension_semantics = [#tpu.dimension_semantics<parallel>], iteration_bounds = array<i64: 1>, scalar_prefetch = 0 : i64, scratch_operands = 0 : i64, tpu.core_type = #tpu.core_type<tc>, window_params = [{transform_indices = @transform_0, window_bounds = array<i64: 16, 32>}, {pipeline_mode = #tpu.pipeline_mode<synchronous>, transform_indices = @transform_1, window_bounds = array<i64: 32, 128>}, {pipeline_mode = #tpu.pipeline_mode<synchronous>, transform_indices = @transform_2, window_bounds = array<i64: 1, 128>}, {pipeline_mode = #tpu.pipeline_mode<synchronous>, transform_indices = @transform_3, window_bounds = array<i64: 128, 128>}, {pipeline_mode = #tpu.pipeline_mode<synchronous>, transform_indices = @transform_4, window_bounds = array<i64: 1, 128>}, {transform_indices = @transform_5, window_bounds = array<i64: 16, 128>}]} {
    %c0 = arith.constant 0 : index
    %c0_0 = arith.constant 0 : index
    %0 = vector.load %arg1[%c0, %c0_0] : memref<16x32xf32, #tpu.memory_space<vmem>>, vector<16x32xf32>
    %1 = arith.truncf %0 : vector<16x32xf32> to vector<16x32xbf16>
    %c0_1 = arith.constant 0 : index
    %c0_2 = arith.constant 0 : index
    %2 = vector.load %arg2[%c0_1, %c0_2] : memref<32x128xbf16, #tpu.memory_space<vmem>>, vector<32x128xbf16>
    %cst = arith.constant dense<0.000000e+00> : vector<16x128xf32>
    %3 = tpu.matmul %1, %2, %cst {dimension_numbers = #tpu.dot_dimension_numbers<[1], [0], [0], [1], [0, 0, 1, 1], [], []>} : vector<16x32xbf16>, vector<32x128xbf16>, vector<16x128xf32> -> vector<16x128xf32>
    %c0_3 = arith.constant 0 : index
    %c0_4 = arith.constant 0 : index
    %4 = vector.load %arg3[%c0_3, %c0_4] : memref<1x128xf32, #tpu.memory_space<vmem>>, vector<1x128xf32>
    %5 = vector.broadcast %4 : vector<1x128xf32> to vector<16x128xf32>
    %6 = arith.addf %3, %5 : vector<16x128xf32>
    %cst_5 = arith.constant 0.000000e+00 : f32
    %7 = vector.broadcast %cst_5 : f32 to vector<16x128xf32>
    %8 = arith.maximumf %6, %7 : vector<16x128xf32>
    %9 = arith.truncf %8 : vector<16x128xf32> to vector<16x128xbf16>
    %c0_6 = arith.constant 0 : index
    %c0_7 = arith.constant 0 : index
    %10 = vector.load %arg4[%c0_6, %c0_7] : memref<128x128xbf16, #tpu.memory_space<vmem>>, vector<128x128xbf16>
    %cst_8 = arith.constant dense<0.000000e+00> : vector<16x128xf32>
    %11 = tpu.matmul %9, %10, %cst_8 {dimension_numbers = #tpu.dot_dimension_numbers<[1], [0], [0], [1], [0, 0, 1, 1], [], []>} : vector<16x128xbf16>, vector<128x128xbf16>, vector<16x128xf32> -> vector<16x128xf32>
    %c0_9 = arith.constant 0 : index
    %c0_10 = arith.constant 0 : index
    %12 = vector.load %arg5[%c0_9, %c0_10] : memref<1x128xf32, #tpu.memory_space<vmem>>, vector<1x128xf32>
    %13 = vector.broadcast %12 : vector<1x128xf32> to vector<16x128xf32>
    %14 = arith.addf %11, %13 : vector<16x128xf32>
    %15 = math.tanh %14 : vector<16x128xf32>
    %16 = arith.truncf %15 : vector<16x128xf32> to vector<16x128xbf16>
    %c0_11 = arith.constant 0 : index
    %c0_12 = arith.constant 0 : index
    %17 = vector.load %arg6[%c0_11, %c0_12] : memref<16x128xbf16, #tpu.memory_space<vmem>>, vector<16x128xbf16>
    tpu.vector_store %arg6[%c0_11, %c0_12], %16 {strides = array<i32>} : memref<16x128xbf16, #tpu.memory_space<vmem>>, vector<16x128xbf16>,
    return
  }
  func.func @transform_0(%arg0: i32) -> (i32, i32) {
    %c0_i32 = arith.constant 0 : i32
    %c0_i32_0 = arith.constant 0 : i32
    return %arg0, %c0_i32 : i32, i32
  }
  func.func @transform_1(%arg0: i32) -> (i32, i32) {
    %c0_i32 = arith.constant 0 : i32
    %c0_i32_0 = arith.constant 0 : i32
    %c0_i32_1 = arith.constant 0 : i32
    return %c0_i32, %c0_i32_0 : i32, i32
  }
  func.func @transform_2(%arg0: i32) -> (i32, i32) {
    %c0_i32 = arith.constant 0 : i32
    %c0_i32_0 = arith.constant 0 : i32
    %c0_i32_1 = arith.constant 0 : i32
    return %c0_i32, %c0_i32_0 : i32, i32
  }
  func.func @transform_3(%arg0: i32) -> (i32, i32) {
    %c0_i32 = arith.constant 0 : i32
    %c0_i32_0 = arith.constant 0 : i32
    %c0_i32_1 = arith.constant 0 : i32
    return %c0_i32, %c0_i32_0 : i32, i32
  }
  func.func @transform_4(%arg0: i32) -> (i32, i32) {
    %c0_i32 = arith.constant 0 : i32
    %c0_i32_0 = arith.constant 0 : i32
    %c0_i32_1 = arith.constant 0 : i32
    return %c0_i32, %c0_i32_0 : i32, i32
  }
  func.func @transform_5(%arg0: i32) -> (i32, i32) {
    %c0_i32 = arith.constant 0 : i32
    %c0_i32_0 = arith.constant 0 : i32
    return %arg0, %c0_i32 : i32, i32
  }
}

</mosaic_0001>

<llo_original>
// kernel: generator_forward.1
$region0: #{generator_forward.1}
  #allocation0 [shape = 'u32[]', space=smem, size = 0x4, offset = 0x4, fixed_abs, tag = 'smem constant byte address 0x4 - core index']
  #allocation1 [shape = 'u32[144,128]{1,0:T(1,128)}', space=vmem, size = 0x12000, scoped, tag = 'internal scratch']
  %s0 = inlined_call_operand.vmem [shape: f32[8,32], index: 0, kind: input, shape index: {}]
  %s1 = inlined_call_operand.vmem [shape: bf16[32,128], index: 1, kind: input, shape index: {}]
  %s2 = inlined_call_operand.vmem [shape: f32[1,128], index: 2, kind: input, shape index: {}]
  %s3 = inlined_call_operand.vmem [shape: bf16[128,128], index: 3, kind: input, shape index: {}]
  %s4 = inlined_call_operand.vmem [shape: f32[1,128], index: 4, kind: input, shape index: {}]
  %s5 = inlined_call_operand.vmem [shape: bf16[8,128], index: 5, kind: output, shape index: {}]
  %s6 = sld [smem:[#allocation0]]
  $region60: #{generator_forward.1} parent=0
    _
  %s8 = ssub.s32 1, %s6
  %s9 = scalar_select 0, %s8, %s6
  $region1: #{generator_forward.1} parent=0
    #allocation2 [shape = 'u8[4096]{0}', space=vmem, size = 0x1000, scoped, tag = 'output window, operand 0, single buffered']
    // Predicated region
    $region2: #{generator_forward.1} parent=1 // pred_check
      _
    $region3: #{generator_forward.1} parent=1 // pred_check_branch
      %11 = sbr.rel (0) target = $region5
    $region4: #{generator_forward.1} parent=1 // pred_region
      _
    $region5: #{generator_forward.1} parent=1 // pred_fallthru
      _
    // Predicated region
    $region6: #{generator_forward.1} parent=1 // pred_check
      _
    $region7: #{generator_forward.1} parent=1 // pred_check_branch
      %13 = sbr.rel (0) target = $region9
    $region8: #{generator_forward.1} parent=1 // pred_region
      _
    $region9: #{generator_forward.1} parent=1 // pred_fallthru
      _
    // Predicated region
    $region10: #{generator_forward.1} parent=1 // pred_check
      _
    $region11: #{generator_forward.1} parent=1 // pred_check_branch
      %15 = sbr.rel (0) target = $region13
    $region12: #{generator_forward.1} parent=1 // pred_region
      _
    $region13: #{generator_forward.1} parent=1 // pred_fallthru
      _
    // Predicated region
    $region14: #{generator_forward.1} parent=1 // pred_check
      _
    $region15: #{generator_forward.1} parent=1 // pred_check_branch
      %17 = sbr.rel (0) target = $region17
    $region16: #{generator_forward.1} parent=1 // pred_region
      _
    $region17: #{generator_forward.1} parent=1 // pred_fallthru
      _
    // Predicated region
    $region18: #{generator_forward.1} parent=1 // pred_check
      _
    $region19: #{generator_forward.1} parent=1 // pred_check_branch
      %19 = sbr.rel (0) target = $region21
    $region20: #{generator_forward.1} parent=1 // pred_region
      _
    $region21: #{generator_forward.1} parent=1 // pred_fallthru
      _
    %v21 = vld [vmem:[%s0] sm:$0xff]
    %v22 = vld [vmem:[%s0 + $0x8] sm:$0xff]
    %v23 = vpack.c.bf16 %v22, %v21
    %v24 = vld [vmem:[%s1] sm:$0xf]
    %v25 = vld [vmem:[%s1 + $0x4] sm:$0xf]
    %v26 = vld [vmem:[%s1 + $0x8] sm:$0xf]
    %v27 = vld [vmem:[%s1 + $0xc] sm:$0xf]
    %v28 = vld [vmem:[%s2] sm:$0x1]
    %v30 = vlaneseq
    %v31 = vshrl.u32 %v30, 7
    %v32 = vsub.s32 0, %v31
    %v33 = vrot.slane %v28, %v32
    %v39 = vunpack.c.l.b16 %v24
    %v40 = vunpack.c.l.b16 %v25
    %v41 = vunpack.c.l.b16 %v26
    %v42 = vunpack.c.l.b16 %v27
    %v43 = vpack.c.b16 %v40, %v39
    %v44 = vpack.c.b16 %v42, %v41
    %vm47 = vcmask 261120
    %v49 = vsel %vm47, %v23, 0
    %51 = vmatprep.subr.bf16.mxu0 0
    %52 = vmatpush1.bf16.msra.mxu0 %v43
    %53 = vmatprep.subr.bf16.mxu0 0
    %54 = vmatpush1.bf16.msra.mxu0 %v44
    %55 = vmatprep.subr.bf16.mxu0 0
    %56 = vmatpush1.bf16.msra.mxu0 0
    %57 = vmatprep.subr.bf16.mxu0 0
    %58 = vmatpush1.bf16.msra.mxu0 0
    %59 = vmatprep.subr.bf16.mxu0 0
    %60 = vmatpush1.bf16.msra.mxu0 0
    %61 = vmatprep.subr.bf16.mxu0 0
    %62 = vmatpush1.bf16.msra.mxu0 0
    %63 = vmatprep.subr.bf16.mxu0 0
    %64 = vmatpush1.bf16.msra.mxu0 0
    %65 = vmatprep.subr.bf16.mxu0 0
    %66 = vmatpush1.bf16.msra.mxu0 0
    %67 = vmatprep.subr.bf16.mxu0 0
    %68 = vmatpush1.bf16.msra.mxu0 0
    %69 = vmatprep.subr.bf16.mxu0 0
    %70 = vmatpush1.bf16.msra.mxu0 0
    %71 = vmatprep.subr.bf16.mxu0 0
    %72 = vmatpush1.bf16.msra.mxu0 0
    %73 = vmatprep.subr.bf16.mxu0 0
    %74 = vmatpush1.bf16.msra.mxu0 0
    %75 = vmatprep.subr.bf16.mxu0 0
    %76 = vmatpush1.bf16.msra.mxu0 0
    %77 = vmatprep.subr.bf16.mxu0 0
    %78 = vmatpush1.bf16.msra.mxu0 0
    %79 = vmatprep.subr.bf16.mxu0 0
    %80 = vmatpush1.bf16.msra.mxu0 0
    %81 = vmatprep.subr.bf16.mxu0 0
    %82 = vmatpush1.bf16.msra.mxu0 0
    %83 = vmatprep.mubr.bf16.mxu0 0
    %84 = vmatmul.mubr.bf16.gmra.mrb[0].mxu0 %v49
    %v85 = vpop.f32.mrb[0].mxu0
    %v86 = vadd.f32 %v33, %v85
    %v87 = vpop.f32.mrb[0].mxu0
    %v88 = vpop.f32.mrb[0].mxu0
    %v89 = vadd.f32 %v33, %v88
    %v90 = vpop.f32.mrb[0].mxu0
    %91 = vdwg.mxu0
    %v92 = vmax.f32 %v86, 0.0
    %v93 = vmax.f32 %v89, 0.0
    %v94 = vpack.c.bf16 %v93, %v92
    %v95 = vld [vmem:[%s3] sm:$0xf]
    %v96 = vld [vmem:[%s3 + $0x4] sm:$0xf]
    %v97 = vld [vmem:[%s3 + $0x8] sm:$0xf]
    %v98 = vld [vmem:[%s3 + $0xc] sm:$0xf]
    %v99 = vld [vmem:[%s3 + $0x10] sm:$0xf]
    %v100 = vld [vmem:[%s3 + $0x14] sm:$0xf]
    %v101 = vld [vmem:[%s3 + $0x18] sm:$0xf]
    %v102 = vld [vmem:[%s3 + $0x1c] sm:$0xf]
    %v103 = vld [vmem:[%s3 + $0x20] sm:$0xf]
    %v104 = vld [vmem:[%s3 + $0x24] sm:$0xf]
    %v105 = vld [vmem:[%s3 + $0x28] sm:$0xf]
    %v106 = vld [vmem:[%s3 + $0x2c] sm:$0xf]
    %v107 = vld [vmem:[%s3 + $0x30] sm:$0xf]
    %v108 = vld [vmem:[%s3 + $0x34] sm:$0xf]
    %v109 = vld [vmem:[%s3 + $0x38] sm:$0xf]
    %v110 = vld [vmem:[%s3 + $0x3c] sm:$0xf]
    %v111 = vld [vmem:[%s4] sm:$0x1]
    %v113 = vlaneseq
    %v114 = vshrl.u32 %v113, 7
    %v115 = vsub.s32 0, %v114
    %v116 = vrot.slane %v111, %v115
    %v134 = vunpack.c.l.b16 %v95
    %v135 = vunpack.c.l.b16 %v96
    %v136 = vunpack.c.l.b16 %v97
    %v137 = vunpack.c.l.b16 %v98
    %v138 = vunpack.c.l.b16 %v99
    %v139 = vunpack.c.l.b16 %v100
    %v140 = vunpack.c.l.b16 %v101
    %v141 = vunpack.c.l.b16 %v102
    %v142 = vunpack.c.l.b16 %v103
    %v143 = vunpack.c.l.b16 %v104
    %v144 = vunpack.c.l.b16 %v105
    %v145 = vunpack.c.l.b16 %v106
    %v146 = vunpack.c.l.b16 %v107
    %v147 = vunpack.c.l.b16 %v108
    %v148 = vunpack.c.l.b16 %v109
    %v149 = vunpack.c.l.b16 %v110
    %v150 = vpack.c.b16 %v135, %v134
    %v151 = vpack.c.b16 %v137, %v136
    %v152 = vpack.c.b16 %v139, %v138
    %v153 = vpack.c.b16 %v141, %v140
    %v154 = vpack.c.b16 %v143, %v142
    %v155 = vpack.c.b16 %v145, %v144
    %v156 = vpack.c.b16 %v147, %v146
    %v157 = vpack.c.b16 %v149, %v148
    %166 = vmatprep.subr.bf16.mxu0 0
    %167 = vmatpush1.bf16.msra.mxu0 %v150
    %168 = vmatprep.subr.bf16.mxu0 0
    %169 = vmatpush1.bf16.msra.mxu0 %v151
    %170 = vmatprep.subr.bf16.mxu0 0
    %171 = vmatpush1.bf16.msra.mxu0 %v152
    %172 = vmatprep.subr.bf16.mxu0 0
    %173 = vmatpush1.bf16.msra.mxu0 %v153
    %174 = vmatprep.subr.bf16.mxu0 0
    %175 = vmatpush1.bf16.msra.mxu0 %v154
    %176 = vmatprep.subr.bf16.mxu0 0
    %177 = vmatpush1.bf16.msra.mxu0 %v155
    %178 = vmatprep.subr.bf16.mxu0 0
    %179 = vmatpush1.bf16.msra.mxu0 %v156
    %180 = vmatprep.subr.bf16.mxu0 0
    %181 = vmatpush1.bf16.msra.mxu0 %v157
    %182 = vmatprep.subr.bf16.mxu0 0
    %183 = vmatpush1.bf16.msra.mxu0 0
    %184 = vmatprep.subr.bf16.mxu0 0
    %185 = vmatpush1.bf16.msra.mxu0 0
    %186 = vmatprep.subr.bf16.mxu0 0
    %187 = vmatpush1.bf16.msra.mxu0 0
    %188 = vmatprep.subr.bf16.mxu0 0
    %189 = vmatpush1.bf16.msra.mxu0 0
    %190 = vmatprep.subr.bf16.mxu0 0
    %191 = vmatpush1.bf16.msra.mxu0 0
    %192 = vmatprep.subr.bf16.mxu0 0
    %193 = vmatpush1.bf16.msra.mxu0 0
    %194 = vmatprep.subr.bf16.mxu0 0
    %195 = vmatpush1.bf16.msra.mxu0 0
    %196 = vmatprep.subr.bf16.mxu0 0
    %197 = vmatpush1.bf16.msra.mxu0 0
    %198 = vmatprep.mubr.bf16.mxu0 0
    %199 = vmatmul.mubr.bf16.gmra.mrb[0].mxu0 %v94
    %v200 = vpop.f32.mrb[0].mxu0
    %v201 = vadd.f32 %v116, %v200
    %v202 = vpop.f32.mrb[0].mxu0
    %v203 = vpop.f32.mrb[0].mxu0
    %v204 = vadd.f32 %v116, %v203
    %v205 = vpop.f32.mrb[0].mxu0
    %206 = vdwg.mxu0
    %v207 = vtanh.pop %v201
    %v208 = vtanh.pop %v204
    %v209 = vpack.c.bf16 %v208, %v207
    %v211 = vunpack.c.l.b16 %v209
    %v212 = vunpack.c.h.b16 %v209
    %v213 = vpack.c.b16 %v211, %v211
    %v214 = vpack.c.b16 %v212, %v212
    %217 = vst [vmem:[#allocation2] sm:$0xf] %v213
    %218 = vst [vmem:[#allocation2 + $0x4] sm:$0xf] %v214
    // Predicated region
    $region22: #{generator_forward.1} parent=1 // pred_check
      _
    $region23: #{generator_forward.1} parent=1 // pred_check_branch
      %220 = sbr.rel (0) target = $region25
    $region24: #{generator_forward.1} parent=1 // pred_region
      // Predicated region
      $region26: #{generator_forward.1} parent=24 // pred_check
        _
      $region27: #{generator_forward.1} parent=24 // pred_check_branch
        %222 = sbr.rel (0) target = $region29
      $region28: #{generator_forward.1} parent=24 // pred_region
        // Predicated region
        $region30: #{generator_forward.1} parent=28 // pred_check
          _
        $region31: #{generator_forward.1} parent=28 // pred_check_branch
          %224 = sbr.rel target = $region33
        $region32: #{generator_forward.1} parent=28 // pred_region
          // Predicated region
          $region45: #{generator_forward.1} parent=32 // pred_check
            _
          $region46: #{generator_forward.1} parent=32 // pred_check_branch
            %239 = sbr.rel (0) target = $region48
          $region47: #{generator_forward.1} parent=32 // pred_region
            loop: start=0, step=1, limit=1
            $region49: #{generator_forward.1} parent=47 // loop_pre_header
              _
            $region50: #{generator_forward.1} parent=47 // loop_header
              %s242 = sphi 0, %s246
              %p243 = scmp.ge.s32.totalorder %s242, 1
              %s247 = sphi [#allocation2], [#allocation2]
              %s248 = sphi %s5, %s5
            $region51: #{generator_forward.1} parent=47 // loop_header_branch
              %245 = sbr.rel (%p243) target = $region55
            $region52: #{generator_forward.1} parent=47 // loop_body
              %v249 = vld [vmem:[%s247] sm:$0xf]
              %250 = vst [vmem:[%s248] sm:$0xf] %v249
            $region53: #{generator_forward.1} parent=47 // loop_footer
              %s246 = sadd.s32 1, %s242
            $region54: #{generator_forward.1} parent=47 // loop_footer_branch
              %241 = sbr.rel target = $region50
            $region55: #{generator_forward.1} parent=47 // loop_exit
              _
          $region48: #{generator_forward.1} parent=32 // pred_fallthru
            _
        $region33: #{generator_forward.1} parent=28 // pred_fallthru
          _
        // Predicated region
        $region34: #{generator_forward.1} parent=28 // pred_check
          _
        $region35: #{generator_forward.1} parent=28 // pred_check_branch
          %226 = sbr.rel (0) target = $region37
        $region36: #{generator_forward.1} parent=28 // pred_region
          loop: start=0, step=1, limit=1
          $region38: #{generator_forward.1} parent=36 // loop_pre_header
            _
          $region39: #{generator_forward.1} parent=36 // loop_header
            %s229 = sphi 0, %s233
            %p230 = scmp.ge.s32.totalorder %s229, 1
            %s234 = sphi [#allocation2], [#allocation2]
            %s235 = sphi %s5, %s5
          $region40: #{generator_forward.1} parent=36 // loop_header_branch
            %232 = sbr.rel (%p230) target = $region44
          $region41: #{generator_forward.1} parent=36 // loop_body
            %v236 = vld [vmem:[%s234] sm:$0xf]
            %237 = vst [vmem:[%s235] sm:$0xf] %v236
          $region42: #{generator_forward.1} parent=36 // loop_footer
            %s233 = sadd.s32 1, %s229
          $region43: #{generator_forward.1} parent=36 // loop_footer_branch
            %228 = sbr.rel target = $region39
          $region44: #{generator_forward.1} parent=36 // loop_exit
            _
        $region37: #{generator_forward.1} parent=28 // pred_fallthru
          _
      $region29: #{generator_forward.1} parent=24 // pred_fallthru
        _
      %251 = vnop
    $region25: #{generator_forward.1} parent=1 // pred_fallthru
      _
    // Predicated region
    $region56: #{generator_forward.1} parent=1 // pred_check
      _
    $region57: #{generator_forward.1} parent=1 // pred_check_branch
      %253 = sbr.rel (0) target = $region59
    $region58: #{generator_forward.1} parent=1 // pred_region
      _
    $region59: #{generator_forward.1} parent=1 // pred_fallthru
      _

</llo_original>
